<compile_context>
chip_gen: v7x
topology: tpu7x:2x2x1
jax: 0.10.0
libtpu: 0.0.40
codegen_flags: <defaults>
</compile_context>

<pallas_src>
import functools

import jax
import jax.numpy as jnp
from jax import lax
from jax.experimental import pallas as pl
from jax.experimental.pallas import tpu as pltpu

IN_FEATURES = 8
OUT_FEATURES = 4

# Natural-layout (tile_b, 8) f32 input blocks are lane-padded to 128 in VMEM
# (16x inflation): ~512 B per row.  16K rows -> 8 MiB/buffer, double-buffered
# 16 MiB, plus ~1 MiB of (4, tile_b) output buffers.  That fits the 32 MiB
# scoped-VMEM limit requested below on every generation (v5e default is only
# 16 MiB -> must be raised; v7x has 64 MiB physical), while keeping per-step
# HBM traffic at ~0.75 MiB so the fixed ~0.35 us per-grid-step overhead is a
# small fraction of each step.
_TARGET_TILE_B = 16 * 1024
_VMEM_LIMIT_BYTES = 32 * 1024 * 1024


def _round_up(n: int, m: int) -> int:
    return ((n + m - 1) // m) * m


def policy_kernel(w_ref, b_ref, x_ref, o_ref):
    """Linear(8 -> 4) + Softmax for one batch tile.

    w_ref: (4, 8)       f32 VMEM  (PyTorch (out, in) layout)
    b_ref: (4, 1)       f32 VMEM
    x_ref: (TILE_B, 8)  f32 VMEM  (natural row-major block; no wrapper transpose)
    o_ref: (4, TILE_B)  f32 VMEM  (feature-major: batch on lanes -> lane-dense store)
    """
    x = x_ref[...]                                   # (TILE_B, 8)
    w = w_ref[...]                                   # (4, 8)

    # logits_t[j, b] = sum_k w[j, k] * x[b, k]  ==  w @ x^T  on the MXU.
    logits = lax.dot_general(
        w, x,
        dimension_numbers=(((1,), (1,)), ((), ())),  # contract both dim-1 (k=8)
        preferred_element_type=jnp.float32,
    )                                                # (4, TILE_B)
    logits = logits + b_ref[...]                     # (4, 1) lane-broadcast

    # Numerically-stable softmax over the 4 classes (sublane axis): cheap
    # sublane reductions, full lane density for exp / mul.
    m = jnp.max(logits, axis=0, keepdims=True)       # (1, TILE_B)
    e = jnp.exp(logits - m)                          # (4, TILE_B)
    denom = jnp.sum(e, axis=0, keepdims=True)        # (1, TILE_B)
    inv = pl.reciprocal(denom)                       # exact: rows must sum to 1
    o_ref[...] = (e * inv).astype(o_ref.dtype)       # stacked store, no concat


def _pick_tiling(batch: int, target_tile_b: int):
    """Choose (tile_b, n_tiles).

    - Single full-array block for small batches.
    - Otherwise: lane-aligned (multiple of 128) tiles, split evenly so the
      masked tail of the last block is small, and >= 2 tiles so the
      "parallel" grid axis can feed both v7x TensorCores.
    - No padding: Pallas masks the ragged boundary block (garbage columns in
      the last tile are per-column isolated and dropped on writeback).
    """
    target = max(128, _round_up(target_tile_b, 128))
    if batch <= 1024:
        return batch, 1
    n_tiles = max(2, pl.cdiv(batch, target))
    tile_b = min(target, _round_up(pl.cdiv(batch, n_tiles), 128))
    n_tiles = pl.cdiv(batch, tile_b)
    return tile_b, n_tiles


@functools.partial(jax.jit, static_argnames=("target_tile_b",))
def policy_forward(x, weight, bias, *, target_tile_b=_TARGET_TILE_B):
    """x: (B, 8) f32, weight: (4, 8) f32 (PyTorch layout), bias: (4,) f32.

    Returns softmax(x @ weight.T + bias, axis=-1) with shape (B, 4).
    """
    batch = x.shape[0]
    tile_b, n_tiles = _pick_tiling(batch, target_tile_b)
    bias2 = bias.reshape(OUT_FEATURES, 1)

    out_t = pl.pallas_call(
        policy_kernel,
        out_shape=jax.ShapeDtypeStruct((OUT_FEATURES, batch), jnp.float32),
        grid=(n_tiles,),
        in_specs=[
            pl.BlockSpec((OUT_FEATURES, IN_FEATURES), lambda i: (0, 0)),  # weight
            pl.BlockSpec((OUT_FEATURES, 1), lambda i: (0, 0)),            # bias
            pl.BlockSpec((tile_b, IN_FEATURES), lambda i: (i, 0)),        # x (natural)
        ],
        out_specs=pl.BlockSpec((OUT_FEATURES, tile_b), lambda i: (0, i)),
        compiler_params=pltpu.CompilerParams(
            dimension_semantics=("parallel",),       # megacore / v7x 2-TC sharding
            vmem_limit_bytes=_VMEM_LIMIT_BYTES,      # v5e default (16 MiB) too small
        ),
    )(weight, bias2, x)

    # Module contract is (B, 4); the kernel keeps a lane-dense (4, B)
    # feature-major result and we pay one small XLA transpose pass here.
    return out_t.T


def reference_forward(x, weight, bias):
    logits = x @ weight.T + bias
    return jax.nn.softmax(logits, axis=-1)


if __name__ == "__main__":
    key = jax.random.PRNGKey(0)
    k_x, k_w, k_b = jax.random.split(key, 3)

    B = 8  # small demo batch; Linear(8 -> 4)

    # nn.Linear default init: U(-1/sqrt(in_features), 1/sqrt(in_features)).
    bound = 1.0 / (IN_FEATURES ** 0.5)
    weight = jax.random.uniform(
        k_w, (OUT_FEATURES, IN_FEATURES), jnp.float32, -bound, bound)
    bias = jax.random.uniform(k_b, (OUT_FEATURES,), jnp.float32, -bound, bound)
    x = jax.random.normal(k_x, (B, IN_FEATURES), jnp.float32)

    out = jax.block_until_ready(policy_forward(x, weight, bias))
    ref = reference_forward(x, weight, bias)

    assert out.shape == (B, OUT_FEATURES)
    assert jnp.allclose(out, ref, atol=1e-5, rtol=1e-5), float(
        jnp.max(jnp.abs(out - ref)))
    assert jnp.allclose(jnp.sum(out, axis=-1), jnp.ones((B,)), atol=1e-5)

    print("KERNEL_OK")
</pallas_src>

<mosaic_0001>
module attributes {stable_mosaic.version = 11 : i64} {
  func.func @policy_kernel(%arg0: i32, %arg1: memref<4x8xf32, #tpu.memory_space<vmem>>, %arg2: memref<4x1xf32, #tpu.memory_space<vmem>>, %arg3: memref<8x8xf32, #tpu.memory_space<vmem>>, %arg4: memref<4x8xf32, #tpu.memory_space<vmem>>) attributes {dimension_semantics = [#tpu.dimension_semantics<parallel>], iteration_bounds = array<i64: 1>, scalar_prefetch = 0 : i64, scratch_operands = 0 : i64, tpu.core_type = #tpu.core_type<tc>, window_params = [{pipeline_mode = #tpu.pipeline_mode<synchronous>, transform_indices = @transform_0, window_bounds = array<i64: 4, 8>}, {pipeline_mode = #tpu.pipeline_mode<synchronous>, transform_indices = @transform_1, window_bounds = array<i64: 4, 1>}, {transform_indices = @transform_2, window_bounds = array<i64: 8, 8>}, {transform_indices = @transform_3, window_bounds = array<i64: 4, 8>}]} {
    %c0 = arith.constant 0 : index
    %c0_0 = arith.constant 0 : index
    %0 = vector.load %arg3[%c0, %c0_0] : memref<8x8xf32, #tpu.memory_space<vmem>>, vector<8x8xf32>
    %c0_1 = arith.constant 0 : index
    %c0_2 = arith.constant 0 : index
    %1 = vector.load %arg1[%c0_1, %c0_2] : memref<4x8xf32, #tpu.memory_space<vmem>>, vector<4x8xf32>
    %cst = arith.constant dense<0.000000e+00> : vector<4x8xf32>
    %2 = tpu.matmul %1, %0, %cst {dimension_numbers = #tpu.dot_dimension_numbers<[1], [1], [0], [0], [0, 0, 1, 0], [], []>} : vector<4x8xf32>, vector<8x8xf32>, vector<4x8xf32> -> vector<4x8xf32>
    %c0_3 = arith.constant 0 : index
    %c0_4 = arith.constant 0 : index
    %3 = vector.load %arg2[%c0_3, %c0_4] : memref<4x1xf32, #tpu.memory_space<vmem>>, vector<4x1xf32>
    %4 = vector.broadcast %3 : vector<4x1xf32> to vector<4x8xf32>
    %5 = arith.addf %2, %4 : vector<4x8xf32>
    %cst_5 = arith.constant dense<0xFF800000> : vector<8xf32>
    %6 = vector.multi_reduction <maximumf>, %5, %cst_5 [0] : vector<4x8xf32> to vector<8xf32>
    %7 = vector.shape_cast %6 : vector<8xf32> to vector<1x8xf32>
    %8 = vector.broadcast %7 : vector<1x8xf32> to vector<4x8xf32>
    %9 = arith.subf %5, %8 : vector<4x8xf32>
    %10 = math.exp %9 : vector<4x8xf32>
    %cst_6 = arith.constant dense<0.000000e+00> : vector<8xf32>
    %11 = vector.multi_reduction <add>, %10, %cst_6 [0] : vector<4x8xf32> to vector<8xf32>
    %12 = vector.shape_cast %11 : vector<8xf32> to vector<1x8xf32>
    %13 = tpu.reciprocal %12 : vector<1x8xf32> -> vector<1x8xf32>
    %14 = vector.broadcast %13 : vector<1x8xf32> to vector<4x8xf32>
    %15 = arith.mulf %10, %14 : vector<4x8xf32>
    %c0_7 = arith.constant 0 : index
    %c0_8 = arith.constant 0 : index
    %16 = vector.load %arg4[%c0_7, %c0_8] : memref<4x8xf32, #tpu.memory_space<vmem>>, vector<4x8xf32>
    tpu.vector_store %arg4[%c0_7, %c0_8], %15 {strides = array<i32>} : memref<4x8xf32, #tpu.memory_space<vmem>>, vector<4x8xf32>,
    return
  }
  func.func @transform_0(%arg0: i32) -> (i32, i32) {
    %c0_i32 = arith.constant 0 : i32
    %c0_i32_0 = arith.constant 0 : i32
    %c0_i32_1 = arith.constant 0 : i32
    return %c0_i32, %c0_i32_0 : i32, i32
  }
  func.func @transform_1(%arg0: i32) -> (i32, i32) {
    %c0_i32 = arith.constant 0 : i32
    %c0_i32_0 = arith.constant 0 : i32
    %c0_i32_1 = arith.constant 0 : i32
    return %c0_i32, %c0_i32_0 : i32, i32
  }
  func.func @transform_2(%arg0: i32) -> (i32, i32) {
    %c0_i32 = arith.constant 0 : i32
    %c0_i32_0 = arith.constant 0 : i32
    return %arg0, %c0_i32 : i32, i32
  }
  func.func @transform_3(%arg0: i32) -> (i32, i32) {
    %c0_i32 = arith.constant 0 : i32
    %c0_i32_0 = arith.constant 0 : i32
    return %c0_i32, %arg0 : i32, i32
  }
}

</mosaic_0001>

<llo_original>
// kernel: policy_forward.1
$region0: #{policy_forward.1}
  #allocation0 [shape = 'u32[]', space=smem, size = 0x4, offset = 0x4, fixed_abs, tag = 'smem constant byte address 0x4 - core index']
  #allocation1 [shape = 'u32[144,128]{1,0:T(1,128)}', space=vmem, size = 0x12000, scoped, tag = 'internal scratch']
  %s0 = inlined_call_operand.vmem [shape: f32[4,8], index: 0, kind: input, shape index: {}]
  %s1 = inlined_call_operand.vmem [shape: f32[4,1], index: 1, kind: input, shape index: {}]
  %s2 = inlined_call_operand.vmem [shape: f32[8,8], index: 2, kind: input, shape index: {}]
  %s3 = inlined_call_operand.hbm [shape: f32[4,8], index: 3, kind: output, shape index: {}]
  %s4 = sld [smem:[#allocation0]]
  $region22: #{policy_forward.1} parent=0
    _
  %s6 = ssub.s32 1, %s4
  %s7 = scalar_select 0, %s6, %s4
  $region1: #{policy_forward.1} parent=0
    #allocation2 [shape = 'u8[2048]{0}', space=vmem, size = 0x800, scoped, tag = 'output window, operand 0, single buffered']
    #allocation3 [shape = 's32[1]{0}', space=sflag, size = 0x4, scoped, tag = 'scoped memory for policy_forward.1']
    %8 = vsyncpa [#allocation3], 0
    // Predicated region
    $region2: #{policy_forward.1} parent=1 // pred_check
      _
    $region3: #{policy_forward.1} parent=1 // pred_check_branch
      %10 = sbr.rel (0) target = $region5
    $region4: #{policy_forward.1} parent=1 // pred_region
      _
    $region5: #{policy_forward.1} parent=1 // pred_fallthru
      _
    // Predicated region
    $region6: #{policy_forward.1} parent=1 // pred_check
      _
    $region7: #{policy_forward.1} parent=1 // pred_check_branch
      %12 = sbr.rel (0) target = $region9
    $region8: #{policy_forward.1} parent=1 // pred_region
      _
    $region9: #{policy_forward.1} parent=1 // pred_fallthru
      _
    // Predicated region
    $region10: #{policy_forward.1} parent=1 // pred_check
      _
    $region11: #{policy_forward.1} parent=1 // pred_check_branch
      %14 = sbr.rel (0) target = $region13
    $region12: #{policy_forward.1} parent=1 // pred_region
      _
    $region13: #{policy_forward.1} parent=1 // pred_fallthru
      _
    %v15 = vld [vmem:[%s2] sm:$0xff]
    %v16 = vld [vmem:[%s0] sm:$0xf]
    %v17 = vld [vmem:[%s1] sm:$0xf]
    %19 = vset.pattern.permute.xlu0 0
    %20 = vperm.xlu0 %19, %v17
    %v21 = vpop.permute.xlu0 %20
    %vm23 = vcmask 64512
    %v25 = vsel %vm23, %v16, 0
    %v28 = vsel %vm23, %v15, 0
    %30 = vmatprep.subr.mxu0 0.0
    %31 = vmatpush1.xpose.msra.mxu0 %v28
    %32 = vmatprep.subr.mxu0 0.0
    %33 = vmatpush1.xpose.msra.mxu0 0.0
    %34 = vmatprep.subr.mxu0 0.0
    %35 = vmatpush1.xpose.msra.mxu0 0.0
    %36 = vmatprep.subr.mxu0 0.0
    %37 = vmatpush1.xpose.msra.mxu0 0.0
    %38 = vmatprep.subr.mxu0 0.0
    %39 = vmatpush1.xpose.msra.mxu0 0.0
    %40 = vmatprep.subr.mxu0 0.0
    %41 = vmatpush1.xpose.msra.mxu0 0.0
    %42 = vmatprep.subr.mxu0 0.0
    %43 = vmatpush1.xpose.msra.mxu0 0.0
    %44 = vmatprep.subr.mxu0 0.0
    %45 = vmatpush1.xpose.msra.mxu0 0.0
    %46 = vmatprep.subr.mxu0 0.0
    %47 = vmatpush1.xpose.msra.mxu0 0.0
    %48 = vmatprep.subr.mxu0 0.0
    %49 = vmatpush1.xpose.msra.mxu0 0.0
    %50 = vmatprep.subr.mxu0 0.0
    %51 = vmatpush1.xpose.msra.mxu0 0.0
    %52 = vmatprep.subr.mxu0 0.0
    %53 = vmatpush1.xpose.msra.mxu0 0.0
    %54 = vmatprep.subr.mxu0 0.0
    %55 = vmatpush1.xpose.msra.mxu0 0.0
    %56 = vmatprep.subr.mxu0 0.0
    %57 = vmatpush1.xpose.msra.mxu0 0.0
    %58 = vmatprep.subr.mxu0 0.0
    %59 = vmatpush1.xpose.msra.mxu0 0.0
    %60 = vmatprep.subr.mxu0 0.0
    %61 = vmatpush1.xpose.msra.mxu0 0.0
    %62 = vmatprep.subr.mxu0 0.0
    %63 = vmatpush1.xpose.msra.mxu0 0.0
    %64 = vmatprep.subr.mxu0 0.0
    %65 = vmatpush1.xpose.msra.mxu0 0.0
    %66 = vmatprep.subr.mxu0 0.0
    %67 = vmatpush1.xpose.msra.mxu0 0.0
    %68 = vmatprep.subr.mxu0 0.0
    %69 = vmatpush1.xpose.msra.mxu0 0.0
    %70 = vmatprep.subr.mxu0 0.0
    %71 = vmatpush1.xpose.msra.mxu0 0.0
    %72 = vmatprep.subr.mxu0 0.0
    %73 = vmatpush1.xpose.msra.mxu0 0.0
    %74 = vmatprep.subr.mxu0 0.0
    %75 = vmatpush1.xpose.msra.mxu0 0.0
    %76 = vmatprep.subr.mxu0 0.0
    %77 = vmatpush1.xpose.msra.mxu0 0.0
    %78 = vmatprep.subr.mxu0 0.0
    %79 = vmatpush1.xpose.msra.mxu0 0.0
    %80 = vmatprep.subr.mxu0 0.0
    %81 = vmatpush1.xpose.msra.mxu0 0.0
    %82 = vmatprep.subr.mxu0 0.0
    %83 = vmatpush1.xpose.msra.mxu0 0.0
    %84 = vmatprep.subr.mxu0 0.0
    %85 = vmatpush1.xpose.msra.mxu0 0.0
    %86 = vmatprep.subr.mxu0 0.0
    %87 = vmatpush1.xpose.msra.mxu0 0.0
    %88 = vmatprep.subr.mxu0 0.0
    %89 = vmatpush1.xpose.msra.mxu0 0.0
    %90 = vmatprep.subr.mxu0 0.0
    %91 = vmatpush1.xpose.msra.mxu0 0.0
    %92 = vmatprep.subr.mxu0 0.0
    %93 = vmatpush1.xpose.msra.mxu0 0.0
    %94 = vmatprep.mubr.f32.mxu0 0.0
    %95 = vmatmul.mubr.f32.gmra.mrb[0].mxu0 %v25
    %v96 = vpop.f32.mrb[0].mxu0
    %v97 = vadd.f32 %v21, %v96
    %v98 = vpop.f32.mrb[0].mxu0
    %99 = vdwg.mxu0
    %vm100 = vcmask 60416
    %v101 = vsel %vm100, %v97, -inf
    %v102 = vrot.slane %v101, 4
    %v103 = vmax.f32 %v101, %v102
    %v104 = vrot.slane %v103, 2
    %v105 = vmax.f32 %v103, %v104
    %v106 = vrot.slane %v105, 1
    %v107 = vmax.f32 %v105, %v106
    %v108 = vsub.f32 %v97, %v107
    %v109 = vmul.f32 %v108, 1.442695
    %v110 = vpow.pop %v109
    %v111 = vsel %vm100, %v110, 0.0
    %v112 = vrot.slane %v111, 4
    %v113 = vadd.f32 %v111, %v112
    %v114 = vrot.slane %v113, 2
    %v115 = vadd.f32 %v113, %v114
    %v116 = vrot.slane %v115, 1
    %v117 = vadd.f32 %v115, %v116
    %v118 = vrcp.pop %v117
    %v119 = vmul.f32 %v110, %v118
    %120 = vst.msk [vmem:[#allocation2] sm:$0xf] %vm100, %v119
    // Predicated region
    $region14: #{policy_forward.1} parent=1 // pred_check
      _
    $region15: #{policy_forward.1} parent=1 // pred_check_branch
      %122 = sbr.rel (0) target = $region17
    $region16: #{policy_forward.1} parent=1 // pred_region
      %s124 = ssub.s32 64, 64
      %125 = vsyncadd [#allocation3], %s124
      %s127 = sshll.u32 [#allocation2], 4
      %s128 = int_to_ptr.vmem [resolvable:$true] %s127
      %130 = dma.vmem_to_hbm [thread:$0]  %s128, 64, %s3, [#allocation3]
    $region17: #{policy_forward.1} parent=1 // pred_fallthru
      _
    // Predicated region
    $region18: #{policy_forward.1} parent=1 // pred_check
      _
    $region19: #{policy_forward.1} parent=1 // pred_check_branch
      %132 = sbr.rel (0) target = $region21
    $region20: #{policy_forward.1} parent=1 // pred_region
      %133 = dma.done [#allocation3], 64
    $region21: #{policy_forward.1} parent=1 // pred_fallthru
      _
    %134 = vsyncpa [#allocation3], 1

</llo_original>
